<compile_context>
chip_gen: v7x
topology: tpu7x:2x2x1
jax: 0.10.0
libtpu: 0.0.40
codegen_flags: <defaults>
</compile_context>

<pallas_src>
import functools

import jax
import jax.numpy as jnp
from jax.experimental import pallas as pl
from jax.experimental.pallas import tpu as pltpu


def _round_up(v, m):
    return (v + m - 1) // m * m


def _f32_vmem_bytes(shape):
    """f32 VMEM footprint of an array padded to the native (8, 128) tiling."""
    if len(shape) == 1:
        lead, a, b = 1, 1, shape[0]
    else:
        a, b = shape[-2], shape[-1]
        lead = 1
        for d in shape[:-2]:
            lead *= d
    return 4 * lead * _round_up(a, 8) * _round_up(b, 128)


def _vmem_capacity_bytes():
    """Generation-aware VMEM capacity (falls back to the smallest, v7x's 64 MiB)."""
    try:
        info = pltpu.get_tpu_info()
        cap = getattr(info, "vmem_capacity_bytes", None)
        if cap:
            return int(cap)
    except Exception:
        pass
    return 64 * 1024 * 1024


def _stacked_taps(xpf_ref, *, B_blk, KH, KW, WP, L_out, mxu_dtype):
    """Build the (KH*KW*C_in, B_blk*L_out) RHS from shifted contiguous slices.

    Row order is (tap k = kh*KW + kw, c_in), matching the weight layout below.
    Images are folded into the lane axis (aligned: L_out is a multiple of 128).
    """
    cols = []
    for b in range(B_blk):
        taps = [xpf_ref[b, :, pl.ds(kh * WP + kw, L_out)]
                for kh in range(KH) for kw in range(KW)]
        cols.append(jnp.concatenate(taps, axis=0))            # (KH*KW*C_in, L_out)
    rhs = cols[0] if B_blk == 1 else jnp.concatenate(cols, axis=1)
    return rhs.astype(mxu_dtype)


# ----------------------------------------------------------------------------
# Fast path: fully fused, conv result VMEM-resident across the whole grid.
# Grid = (2 passes, N // B_blk image blocks); both axes sequential.
# ----------------------------------------------------------------------------
def _fused_conv_bn_relu_kernel(xpf_ref, w_ref, g_ref, bt_ref, mask_ref,
                               out_ref,
                               y_buf, sum_ref, sq_ref, scale_ref, shift_ref,
                               *, KH, KW, WP, L_out, B_blk, inv_m, eps, mxu_dtype):
    p = pl.program_id(0)    # 0 = conv + stats, 1 = BN apply + ReLU
    nb = pl.program_id(1)   # image-block index

    # ---------------- pass 0: fused-tap conv + masked sum / sumsq ----------------
    @pl.when(p == 0)
    def _conv_and_stats():
        @pl.when(nb == 0)
        def _():
            sum_ref[...] = jnp.zeros_like(sum_ref)
            sq_ref[...] = jnp.zeros_like(sq_ref)

        rhs = _stacked_taps(xpf_ref, B_blk=B_blk, KH=KH, KW=KW, WP=WP,
                            L_out=L_out, mxu_dtype=mxu_dtype)
        # Single MXU issue: (C_out, K) x (K, B_blk*L_out), f32 accumulation.
        y = jnp.dot(w_ref[...], rhs, preferred_element_type=jnp.float32)
        y_buf[nb] = y                               # stays resident for pass 1

        m = mask_ref[...]                           # (1, B_blk*L_out), 0/1
        sum_ref[...] += (y * m).sum(axis=1, keepdims=True)
        sq_ref[...] += (y * y * m).sum(axis=1, keepdims=True)
        # NOTE: no out_ref write here — the output block index is pinned during
        # pass 0, so the output is written back to HBM exactly once (in pass 1).

    # ---------------- pass 1: finalize affine once, apply BN + ReLU --------------
    @pl.when(p == 1)
    def _bn_relu():
        @pl.when(nb == 0)
        def _():
            mean = sum_ref[...] * inv_m
            var = jnp.maximum(sq_ref[...] * inv_m - mean * mean, 0.0)
            sc = g_ref[...] * jax.lax.rsqrt(var + eps)
            scale_ref[...] = sc
            shift_ref[...] = bt_ref[...] - mean * sc

        yb = jnp.maximum(y_buf[nb] * scale_ref[...] + shift_ref[...], 0.0)
        for b in range(B_blk):                      # aligned lane-dense stores
            out_ref[b] = yb[:, b * L_out:(b + 1) * L_out]


# ----------------------------------------------------------------------------
# Fallback path (activation too large to keep VMEM-resident): two pallas_calls.
#   A) conv + partial stats (accumulated in pinned output blocks)
#   B) elementwise BN + ReLU, applied in place via input_output_aliases
# ----------------------------------------------------------------------------
def _conv_stats_kernel(xpf_ref, w_ref, mask_ref,
                       y_ref, sum_ref, sq_ref,
                       *, KH, KW, WP, L_out, B_blk, mxu_dtype):
    nb = pl.program_id(0)

    @pl.when(nb == 0)
    def _():
        sum_ref[...] = jnp.zeros_like(sum_ref)
        sq_ref[...] = jnp.zeros_like(sq_ref)

    rhs = _stacked_taps(xpf_ref, B_blk=B_blk, KH=KH, KW=KW, WP=WP,
                        L_out=L_out, mxu_dtype=mxu_dtype)
    y = jnp.dot(w_ref[...], rhs, preferred_element_type=jnp.float32)
    m = mask_ref[...]
    sum_ref[...] += (y * m).sum(axis=1, keepdims=True)
    sq_ref[...] += (y * y * m).sum(axis=1, keepdims=True)
    for b in range(B_blk):
        y_ref[b] = y[:, b * L_out:(b + 1) * L_out]


def _bn_relu_apply_kernel(y_ref, scale_ref, shift_ref, out_ref):
    sc = scale_ref[...][None]    # (1, C_out, 1)
    sh = shift_ref[...][None]
    out_ref[...] = jnp.maximum(y_ref[...] * sc + sh, 0.0)


# ----------------------------------------------------------------------------
# Wrapper
# ----------------------------------------------------------------------------
def conv_block_forward(x, weight, bias, gamma, beta, *, stride, padding,
                       eps=1e-5, mxu_dtype=jnp.float32):
    """x: (N, C_in, H, W); weight: (C_out, C_in, KH, KW); returns NCHW f32.

    `bias` is accepted for API parity with nn.Conv2d but is not applied: with
    batch-statistics BatchNorm it cancels exactly (shifts y and mean equally).
    `mxu_dtype=jnp.bfloat16` halves matmul-operand width on v6e/v7x (f32
    accumulation is kept); only worthwhile beyond toy channel counts.
    """
    del bias
    N, C_in, H, W = x.shape
    C_out, _, KH, KW = weight.shape
    OH = (H + 2 * padding - KH) // stride + 1
    OW = (W + 2 * padding - KW) // stride + 1
    HP, WP = H + 2 * padding, W + 2 * padding

    L = HP * WP                          # flattened padded-image positions
    L_out = _round_up(L, 128)            # lane-dense rows per image
    max_shift = (KH - 1) * WP + (KW - 1)
    L_in = max_shift + L_out             # flat input length reachable by the taps
    K = KH * KW * C_in

    # ---- plain-JAX glue: pad + reshape only (no im2col materialisation) -------
    xp = jnp.pad(x.astype(jnp.float32),
                 ((0, 0), (0, 0), (padding, padding), (padding, padding)))
    xpf = jnp.pad(xp.reshape(N, C_in, L), ((0, 0), (0, 0), (0, L_in - L)))
    xpf = xpf.astype(mxu_dtype)

    # weight as (C_out, KH*KW*C_in): columns ordered (tap k, c_in) to match RHS.
    w2 = jnp.transpose(weight, (0, 2, 3, 1)).reshape(C_out, K).astype(mxu_dtype)
    g2 = gamma.reshape(C_out, 1).astype(jnp.float32)
    bt2 = beta.reshape(C_out, 1).astype(jnp.float32)

    # validity mask over flat positions: 1.0 exactly at the OH*OW conv outputs.
    r = jnp.arange(L_out)
    row, col = r // WP, r % WP
    valid = ((r < L) & (row < OH * stride) & (col < OW * stride)
             & (row % stride == 0) & (col % stride == 0))
    mask = valid.astype(jnp.float32).reshape(1, L_out)

    M = N * OH * OW
    inv_m = 1.0 / M

    vmem_cap = _vmem_capacity_bytes()
    budget = int(0.70 * vmem_cap)        # ~45 MiB on v7x, ~90 MiB on v5e/v6e

    def fused_est(b_blk):
        n_blk = N // b_blk
        return (2 * (_f32_vmem_bytes((b_blk, C_in, L_in))
                     + _f32_vmem_bytes((C_out, K))
                     + 2 * _f32_vmem_bytes((C_out, 1))
                     + _f32_vmem_bytes((1, b_blk * L_out)))
                + 2 * _f32_vmem_bytes((b_blk, C_out, L_out))
                + _f32_vmem_bytes((n_blk, C_out, b_blk * L_out))
                + 4 * _f32_vmem_bytes((C_out, 1)))

    def tiled_est(b_blk):
        return (2 * (_f32_vmem_bytes((b_blk, C_in, L_in))
                     + _f32_vmem_bytes((C_out, K))
                     + _f32_vmem_bytes((1, b_blk * L_out)))
                + 2 * (_f32_vmem_bytes((b_blk, C_out, L_out))
                       + 4 * _f32_vmem_bytes((C_out, 1))))

    divisors = [d for d in range(N, 0, -1) if N % d == 0]
    fused_b = next((d for d in divisors if fused_est(d) <= budget), None)

    if fused_b is not None:
        # ------------------------- fully fused fast path -----------------------
        B_blk = fused_b
        n_blk = N // B_blk
        mask_tiled = jnp.tile(mask, (1, B_blk))
        vmem_limit = int(min(fused_est(B_blk) + (4 << 20), vmem_cap))

        kernel = functools.partial(
            _fused_conv_bn_relu_kernel, KH=KH, KW=KW, WP=WP, L_out=L_out,
            B_blk=B_blk, inv_m=inv_m, eps=float(eps), mxu_dtype=mxu_dtype)

        out_flat = pl.pallas_call(
            kernel,
            out_shape=jax.ShapeDtypeStruct((N, C_out, L_out), jnp.float32),
            grid_spec=pltpu.PrefetchScalarGridSpec(
                num_scalar_prefetch=0,
                grid=(2, n_blk),                     # (pass, image block)
                in_specs=[
                    # input block pinned during pass 1 -> fetched ~once overall
                    pl.BlockSpec((B_blk, C_in, L_in),
                                 lambda p, n: (n * (1 - p), 0, 0)),
                    pl.BlockSpec((C_out, K), lambda p, n: (0, 0)),
                    pl.BlockSpec((C_out, 1), lambda p, n: (0, 0)),
                    pl.BlockSpec((C_out, 1), lambda p, n: (0, 0)),
                    pl.BlockSpec((1, B_blk * L_out), lambda p, n: (0, 0)),
                ],
                # output block pinned during pass 0 -> written back exactly once
                out_specs=pl.BlockSpec((B_blk, C_out, L_out),
                                       lambda p, n: (n * p, 0, 0)),
                scratch_shapes=[
                    pltpu.VMEM((n_blk, C_out, B_blk * L_out), jnp.float32),  # y_buf
                    pltpu.VMEM((C_out, 1), jnp.float32),                     # sum
                    pltpu.VMEM((C_out, 1), jnp.float32),                     # sumsq
                    pltpu.VMEM((C_out, 1), jnp.float32),                     # scale
                    pltpu.VMEM((C_out, 1), jnp.float32),                     # shift
                ]),
            compiler_params=pltpu.CompilerParams(
                dimension_semantics=("arbitrary", "arbitrary"),
                vmem_limit_bytes=vmem_limit),
        )(xpf, w2, g2, bt2, mask_tiled)

    else:
        # ------------------- tiled fallback (no y_buf residency) ---------------
        B_blk = next((d for d in divisors if tiled_est(d) <= budget), None)
        if B_blk is None:
            # TODO(synk): additionally tile the flattened spatial axis for
            # single images that do not fit VMEM even on their own.
            raise ValueError("single-image activation exceeds the VMEM budget")
        n_blk = N // B_blk
        mask_tiled = jnp.tile(mask, (1, B_blk))
        vmem_limit = int(min(tiled_est(B_blk) + (4 << 20), vmem_cap))

        conv_kernel = functools.partial(
            _conv_stats_kernel, KH=KH, KW=KW, WP=WP, L_out=L_out,
            B_blk=B_blk, mxu_dtype=mxu_dtype)

        y_flat, s, q = pl.pallas_call(
            conv_kernel,
            out_shape=(jax.ShapeDtypeStruct((N, C_out, L_out), jnp.float32),
                       jax.ShapeDtypeStruct((C_out, 1), jnp.float32),
                       jax.ShapeDtypeStruct((C_out, 1), jnp.float32)),
            grid_spec=pltpu.PrefetchScalarGridSpec(
                num_scalar_prefetch=0,
                grid=(n_blk,),
                in_specs=[
                    pl.BlockSpec((B_blk, C_in, L_in), lambda n: (n, 0, 0)),
                    pl.BlockSpec((C_out, K), lambda n: (0, 0)),
                    pl.BlockSpec((1, B_blk * L_out), lambda n: (0, 0)),
                ],
                out_specs=(
                    pl.BlockSpec((B_blk, C_out, L_out), lambda n: (n, 0, 0)),
                    pl.BlockSpec((C_out, 1), lambda n: (0, 0)),   # pinned accumulator
                    pl.BlockSpec((C_out, 1), lambda n: (0, 0)),   # pinned accumulator
                )),
            compiler_params=pltpu.CompilerParams(
                dimension_semantics=("arbitrary",),
                vmem_limit_bytes=vmem_limit),
        )(xpf, w2, mask_tiled)

        mean = s * inv_m
        var = jnp.maximum(q * inv_m - mean * mean, 0.0)
        scale = g2 * jax.lax.rsqrt(var + float(eps))
        shift = bt2 - mean * scale

        out_flat = pl.pallas_call(
            _bn_relu_apply_kernel,
            out_shape=jax.ShapeDtypeStruct((N, C_out, L_out), jnp.float32),
            grid_spec=pltpu.PrefetchScalarGridSpec(
                num_scalar_prefetch=0,
                grid=(n_blk,),
                in_specs=[
                    pl.BlockSpec((B_blk, C_out, L_out), lambda n: (n, 0, 0)),
                    pl.BlockSpec((C_out, 1), lambda n: (0, 0)),
                    pl.BlockSpec((C_out, 1), lambda n: (0, 0)),
                ],
                out_specs=pl.BlockSpec((B_blk, C_out, L_out), lambda n: (n, 0, 0))),
            compiler_params=pltpu.CompilerParams(
                dimension_semantics=("parallel",),
                vmem_limit_bytes=vmem_limit),
            input_output_aliases={0: 0},      # apply BN+ReLU in place
        )(y_flat, scale, shift)

    # Already (N, C_out, spatial): slice the valid strided positions -> NCHW.
    # TODO(synk): fuse this crop into the consumer (or emit compact OH*OW rows
    # from pass 1) to avoid the extra XLA copy of the output.
    out = out_flat[:, :, :L].reshape(N, C_out, HP, WP)
    out = out[:, :, 0:(OH - 1) * stride + 1:stride, 0:(OW - 1) * stride + 1:stride]
    return out


def _reference(x, weight, bias, gamma, beta, *, stride, padding, eps=1e-5):
    y = jax.lax.conv_general_dilated(
        x, weight, window_strides=(stride, stride),
        padding=[(padding, padding), (padding, padding)],
        dimension_numbers=("NCHW", "OIHW", "NCHW"))
    y = y + bias.reshape(1, -1, 1, 1)
    mean = y.mean(axis=(0, 2, 3), keepdims=True)
    var = y.var(axis=(0, 2, 3), keepdims=True)            # biased, like PyTorch BN
    y = (y - mean) / jnp.sqrt(var + eps)
    y = y * gamma.reshape(1, -1, 1, 1) + beta.reshape(1, -1, 1, 1)
    return jnp.maximum(y, 0.0)


if __name__ == "__main__":
    # ConvBlock(in_filters=4, out_filters=8, kernel_size=3, stride=1, padding=1)
    in_filters, out_filters, kernel_size, stride, padding = 4, 8, 3, 1, 1
    N, H, W = 2, 16, 16

    key = jax.random.PRNGKey(0)
    kx, kw, kb, kg, kbe = jax.random.split(key, 5)
    x = jax.random.normal(kx, (N, in_filters, H, W), dtype=jnp.float32)
    weight = 0.1 * jax.random.normal(
        kw, (out_filters, in_filters, kernel_size, kernel_size), dtype=jnp.float32)
    bias = 0.1 * jax.random.normal(kb, (out_filters,), dtype=jnp.float32)
    gamma = 1.0 + 0.1 * jax.random.normal(kg, (out_filters,), dtype=jnp.float32)
    beta = 0.1 * jax.random.normal(kbe, (out_filters,), dtype=jnp.float32)

    out = conv_block_forward(x, weight, bias, gamma, beta,
                             stride=stride, padding=padding)
    out = jax.block_until_ready(out)

    ref = _reference(x, weight, bias, gamma, beta, stride=stride, padding=padding)
    assert out.shape == (N, out_filters, H, W)
    assert bool(jnp.allclose(out, ref, atol=2e-2, rtol=2e-2))
    print("KERNEL_OK")
</pallas_src>

<mosaic_0001>
module attributes {stable_mosaic.version = 11 : i64} {
  func.func @_fused_conv_bn_relu_kernel(%arg0: i32, %arg1: i32, %arg2: memref<2x4x422xf32, #tpu.memory_space<vmem>>, %arg3: memref<8x36xf32, #tpu.memory_space<vmem>>, %arg4: memref<8x1xf32, #tpu.memory_space<vmem>>, %arg5: memref<8x1xf32, #tpu.memory_space<vmem>>, %arg6: memref<1x768xf32, #tpu.memory_space<vmem>>, %arg7: memref<2x8x384xf32, #tpu.memory_space<vmem>>, %arg8: memref<1x8x768xf32, #tpu.memory_space<vmem>>, %arg9: memref<8x1xf32, #tpu.memory_space<vmem>>, %arg10: memref<8x1xf32, #tpu.memory_space<vmem>>, %arg11: memref<8x1xf32, #tpu.memory_space<vmem>>, %arg12: memref<8x1xf32, #tpu.memory_space<vmem>>) attributes {dimension_semantics = [#tpu.dimension_semantics<arbitrary>, #tpu.dimension_semantics<arbitrary>], iteration_bounds = array<i64: 2, 1>, scalar_prefetch = 0 : i64, scratch_operands = 5 : i64, tpu.core_type = #tpu.core_type<tc>, window_params = [{transform_indices = @transform_0, window_bounds = array<i64: 2, 4, 422>}, {pipeline_mode = #tpu.pipeline_mode<synchronous>, transform_indices = @transform_1, window_bounds = array<i64: 8, 36>}, {pipeline_mode = #tpu.pipeline_mode<synchronous>, transform_indices = @transform_2, window_bounds = array<i64: 8, 1>}, {pipeline_mode = #tpu.pipeline_mode<synchronous>, transform_indices = @transform_3, window_bounds = array<i64: 8, 1>}, {pipeline_mode = #tpu.pipeline_mode<synchronous>, transform_indices = @transform_4, window_bounds = array<i64: 1, 768>}, {transform_indices = @transform_5, window_bounds = array<i64: 2, 8, 384>}]} {
    %c0_i32 = arith.constant 0 : i32
    %0 = arith.cmpi eq, %arg0, %c0_i32 : i32
    %1 = arith.extui %0 : i1 to i32
    %c0_i32_0 = arith.constant 0 : i32
    %2 = arith.cmpi ne, %1, %c0_i32_0 : i32
    scf.if %2 {
      %c0_i32_2 = arith.constant 0 : i32
      %6 = arith.cmpi eq, %arg1, %c0_i32_2 : i32
      %7 = arith.extui %6 : i1 to i32
      %c0_i32_3 = arith.constant 0 : i32
      %8 = arith.cmpi ne, %7, %c0_i32_3 : i32
      scf.if %8 {
        %cst_65 = arith.constant 0.000000e+00 : f32
        %70 = vector.broadcast %cst_65 : f32 to vector<8x1xf32>
        %c0_66 = arith.constant 0 : index
        %c0_67 = arith.constant 0 : index
        %71 = vector.load %arg9[%c0_66, %c0_67] : memref<8x1xf32, #tpu.memory_space<vmem>>, vector<8x1xf32>
        tpu.vector_store %arg9[%c0_66, %c0_67], %70 {strides = array<i32>} : memref<8x1xf32, #tpu.memory_space<vmem>>, vector<8x1xf32>,
        %cst_68 = arith.constant 0.000000e+00 : f32
        %72 = vector.broadcast %cst_68 : f32 to vector<8x1xf32>
        %c0_69 = arith.constant 0 : index
        %c0_70 = arith.constant 0 : index
        %73 = vector.load %arg10[%c0_69, %c0_70] : memref<8x1xf32, #tpu.memory_space<vmem>>, vector<8x1xf32>
        tpu.vector_store %arg10[%c0_69, %c0_70], %72 {strides = array<i32>} : memref<8x1xf32, #tpu.memory_space<vmem>>, vector<8x1xf32>,
      } else {
      }
      %c0 = arith.constant 0 : index
      %c0_4 = arith.constant 0 : index
      %c0_5 = arith.constant 0 : index
      %9 = vector.load %arg2[%c0, %c0_4, %c0_5] : memref<2x4x422xf32, #tpu.memory_space<vmem>>, vector<1x4x384xf32>
      %10 = vector.shape_cast %9 : vector<1x4x384xf32> to vector<4x384xf32>
      %c0_6 = arith.constant 0 : index
      %c0_7 = arith.constant 0 : index
      %c1 = arith.constant 1 : index
      %11 = vector.load %arg2[%c0_6, %c0_7, %c1] : memref<2x4x422xf32, #tpu.memory_space<vmem>>, vector<1x4x384xf32>
      %12 = vector.shape_cast %11 : vector<1x4x384xf32> to vector<4x384xf32>
      %c0_8 = arith.constant 0 : index
      %c0_9 = arith.constant 0 : index
      %c2 = arith.constant 2 : index
      %13 = vector.load %arg2[%c0_8, %c0_9, %c2] : memref<2x4x422xf32, #tpu.memory_space<vmem>>, vector<1x4x384xf32>
      %14 = vector.shape_cast %13 : vector<1x4x384xf32> to vector<4x384xf32>
      %c0_10 = arith.constant 0 : index
      %c0_11 = arith.constant 0 : index
      %c18 = arith.constant 18 : index
      %15 = vector.load %arg2[%c0_10, %c0_11, %c18] : memref<2x4x422xf32, #tpu.memory_space<vmem>>, vector<1x4x384xf32>
      %16 = vector.shape_cast %15 : vector<1x4x384xf32> to vector<4x384xf32>
      %c0_12 = arith.constant 0 : index
      %c0_13 = arith.constant 0 : index
      %c19 = arith.constant 19 : index
      %17 = vector.load %arg2[%c0_12, %c0_13, %c19] : memref<2x4x422xf32, #tpu.memory_space<vmem>>, vector<1x4x384xf32>
      %18 = vector.shape_cast %17 : vector<1x4x384xf32> to vector<4x384xf32>
      %c0_14 = arith.constant 0 : index
      %c0_15 = arith.constant 0 : index
      %c20 = arith.constant 20 : index
      %19 = vector.load %arg2[%c0_14, %c0_15, %c20] : memref<2x4x422xf32, #tpu.memory_space<vmem>>, vector<1x4x384xf32>
      %20 = vector.shape_cast %19 : vector<1x4x384xf32> to vector<4x384xf32>
      %c0_16 = arith.constant 0 : index
      %c0_17 = arith.constant 0 : index
      %c36 = arith.constant 36 : index
      %21 = vector.load %arg2[%c0_16, %c0_17, %c36] : memref<2x4x422xf32, #tpu.memory_space<vmem>>, vector<1x4x384xf32>
      %22 = vector.shape_cast %21 : vector<1x4x384xf32> to vector<4x384xf32>
      %c0_18 = arith.constant 0 : index
      %c0_19 = arith.constant 0 : index
      %c37 = arith.constant 37 : index
      %23 = vector.load %arg2[%c0_18, %c0_19, %c37] : memref<2x4x422xf32, #tpu.memory_space<vmem>>, vector<1x4x384xf32>
      %24 = vector.shape_cast %23 : vector<1x4x384xf32> to vector<4x384xf32>
      %c0_20 = arith.constant 0 : index
      %c0_21 = arith.constant 0 : index
      %c38 = arith.constant 38 : index
      %25 = vector.load %arg2[%c0_20, %c0_21, %c38] : memref<2x4x422xf32, #tpu.memory_space<vmem>>, vector<1x4x384xf32>
      %26 = vector.shape_cast %25 : vector<1x4x384xf32> to vector<4x384xf32>
      %27 = tpu.concatenate %10, %12, %14, %16, %18, %20, %22, %24, %26 in 0 : vector<4x384xf32>, vector<4x384xf32>, vector<4x384xf32>, vector<4x384xf32>, vector<4x384xf32>, vector<4x384xf32>, vector<4x384xf32>, vector<4x384xf32>, vector<4x384xf32> -> vector<36x384xf32>
      %c1_22 = arith.constant 1 : index
      %c0_23 = arith.constant 0 : index
      %c0_24 = arith.constant 0 : index
      %28 = vector.load %arg2[%c1_22, %c0_23, %c0_24] : memref<2x4x422xf32, #tpu.memory_space<vmem>>, vector<1x4x384xf32>
      %29 = vector.shape_cast %28 : vector<1x4x384xf32> to vector<4x384xf32>
      %c1_25 = arith.constant 1 : index
      %c0_26 = arith.constant 0 : index
      %c1_27 = arith.constant 1 : index
      %30 = vector.load %arg2[%c1_25, %c0_26, %c1_27] : memref<2x4x422xf32, #tpu.memory_space<vmem>>, vector<1x4x384xf32>
      %31 = vector.shape_cast %30 : vector<1x4x384xf32> to vector<4x384xf32>
      %c1_28 = arith.constant 1 : index
      %c0_29 = arith.constant 0 : index
      %c2_30 = arith.constant 2 : index
      %32 = vector.load %arg2[%c1_28, %c0_29, %c2_30] : memref<2x4x422xf32, #tpu.memory_space<vmem>>, vector<1x4x384xf32>
      %33 = vector.shape_cast %32 : vector<1x4x384xf32> to vector<4x384xf32>
      %c1_31 = arith.constant 1 : index
      %c0_32 = arith.constant 0 : index
      %c18_33 = arith.constant 18 : index
      %34 = vector.load %arg2[%c1_31, %c0_32, %c18_33] : memref<2x4x422xf32, #tpu.memory_space<vmem>>, vector<1x4x384xf32>
      %35 = vector.shape_cast %34 : vector<1x4x384xf32> to vector<4x384xf32>
      %c1_34 = arith.constant 1 : index
      %c0_35 = arith.constant 0 : index
      %c19_36 = arith.constant 19 : index
      %36 = vector.load %arg2[%c1_34, %c0_35, %c19_36] : memref<2x4x422xf32, #tpu.memory_space<vmem>>, vector<1x4x384xf32>
      %37 = vector.shape_cast %36 : vector<1x4x384xf32> to vector<4x384xf32>
      %c1_37 = arith.constant 1 : index
      %c0_38 = arith.constant 0 : index
      %c20_39 = arith.constant 20 : index
      %38 = vector.load %arg2[%c1_37, %c0_38, %c20_39] : memref<2x4x422xf32, #tpu.memory_space<vmem>>, vector<1x4x384xf32>
      %39 = vector.shape_cast %38 : vector<1x4x384xf32> to vector<4x384xf32>
      %c1_40 = arith.constant 1 : index
      %c0_41 = arith.constant 0 : index
      %c36_42 = arith.constant 36 : index
      %40 = vector.load %arg2[%c1_40, %c0_41, %c36_42] : memref<2x4x422xf32, #tpu.memory_space<vmem>>, vector<1x4x384xf32>
      %41 = vector.shape_cast %40 : vector<1x4x384xf32> to vector<4x384xf32>
      %c1_43 = arith.constant 1 : index
      %c0_44 = arith.constant 0 : index
      %c37_45 = arith.constant 37 : index
      %42 = vector.load %arg2[%c1_43, %c0_44, %c37_45] : memref<2x4x422xf32, #tpu.memory_space<vmem>>, vector<1x4x384xf32>
      %43 = vector.shape_cast %42 : vector<1x4x384xf32> to vector<4x384xf32>
      %c1_46 = arith.constant 1 : index
      %c0_47 = arith.constant 0 : index
      %c38_48 = arith.constant 38 : index
      %44 = vector.load %arg2[%c1_46, %c0_47, %c38_48] : memref<2x4x422xf32, #tpu.memory_space<vmem>>, vector<1x4x384xf32>
      %45 = vector.shape_cast %44 : vector<1x4x384xf32> to vector<4x384xf32>
      %46 = tpu.concatenate %29, %31, %33, %35, %37, %39, %41, %43, %45 in 0 : vector<4x384xf32>, vector<4x384xf32>, vector<4x384xf32>, vector<4x384xf32>, vector<4x384xf32>, vector<4x384xf32>, vector<4x384xf32>, vector<4x384xf32>, vector<4x384xf32> -> vector<36x384xf32>
      %47 = tpu.concatenate %27, %46 in 1 : vector<36x384xf32>, vector<36x384xf32> -> vector<36x768xf32>
      %c0_49 = arith.constant 0 : index
      %c0_50 = arith.constant 0 : index
      %48 = vector.load %arg3[%c0_49, %c0_50] : memref<8x36xf32, #tpu.memory_space<vmem>>, vector<8x36xf32>
      %cst = arith.constant dense<0.000000e+00> : vector<8x768xf32>
      %49 = tpu.matmul %48, %47, %cst {dimension_numbers = #tpu.dot_dimension_numbers<[1], [0], [0], [1], [0, 0, 1, 1], [], []>} : vector<8x36xf32>, vector<36x768xf32>, vector<8x768xf32> -> vector<8x768xf32>
      %50 = arith.index_cast %arg1 : i32 to index
      %c0_51 = arith.constant 0 : index
      %c0_52 = arith.constant 0 : index
      %51 = vector.load %arg8[%50, %c0_51, %c0_52] : memref<1x8x768xf32, #tpu.memory_space<vmem>>, vector<1x8x768xf32>
      %52 = vector.shape_cast %51 : vector<1x8x768xf32> to vector<8x768xf32>
      %53 = vector.shape_cast %49 : vector<8x768xf32> to vector<1x8x768xf32>
      tpu.vector_store %arg8[%50, %c0_51, %c0_52], %53 {strides = array<i32>} : memref<1x8x768xf32, #tpu.memory_space<vmem>>, vector<1x8x768xf32>,
      %c0_53 = arith.constant 0 : index
      %c0_54 = arith.constant 0 : index
      %54 = vector.load %arg6[%c0_53, %c0_54] : memref<1x768xf32, #tpu.memory_space<vmem>>, vector<1x768xf32>
      %c0_55 = arith.constant 0 : index
      %c0_56 = arith.constant 0 : index
      %55 = vector.load %arg9[%c0_55, %c0_56] : memref<8x1xf32, #tpu.memory_space<vmem>>, vector<8x1xf32>
      %56 = vector.broadcast %54 : vector<1x768xf32> to vector<8x768xf32>
      %57 = arith.mulf %49, %56 : vector<8x768xf32>
      %cst_57 = arith.constant dense<0.000000e+00> : vector<8xf32>
      %58 = vector.multi_reduction <add>, %57, %cst_57 [1] : vector<8x768xf32> to vector<8xf32>
      %59 = vector.shape_cast %58 : vector<8xf32> to vector<8x1xf32>
      %60 = arith.addf %55, %59 : vector<8x1xf32>
      %c0_58 = arith.constant 0 : index
      %c0_59 = arith.constant 0 : index
      %61 = vector.load %arg9[%c0_58, %c0_59] : memref<8x1xf32, #tpu.memory_space<vmem>>, vector<8x1xf32>
      tpu.vector_store %arg9[%c0_58, %c0_59], %60 {strides = array<i32>} : memref<8x1xf32, #tpu.memory_space<vmem>>, vector<8x1xf32>,
      %c0_60 = arith.constant 0 : index
      %c0_61 = arith.constant 0 : index
      %62 = vector.load %arg10[%c0_60, %c0_61] : memref<8x1xf32, #tpu.memory_space<vmem>>, vector<8x1xf32>
      %63 = arith.mulf %49, %49 : vector<8x768xf32>
      %64 = vector.broadcast %54 : vector<1x768xf32> to vector<8x768xf32>
      %65 = arith.mulf %63, %64 : vector<8x768xf32>
      %cst_62 = arith.constant dense<0.000000e+00> : vector<8xf32>
      %66 = vector.multi_reduction <add>, %65, %cst_62 [1] : vector<8x768xf32> to vector<8xf32>
      %67 = vector.shape_cast %66 : vector<8xf32> to vector<8x1xf32>
      %68 = arith.addf %62, %67 : vector<8x1xf32>
      %c0_63 = arith.constant 0 : index
      %c0_64 = arith.constant 0 : index
      %69 = vector.load %arg10[%c0_63, %c0_64] : memref<8x1xf32, #tpu.memory_space<vmem>>, vector<8x1xf32>
      tpu.vector_store %arg10[%c0_63, %c0_64], %68 {strides = array<i32>} : memref<8x1xf32, #tpu.memory_space<vmem>>, vector<8x1xf32>,
    } else {
    }
    %c1_i32 = arith.constant 1 : i32
    %3 = arith.cmpi eq, %arg0, %c1_i32 : i32
    %4 = arith.extui %3 : i1 to i32
    %c0_i32_1 = arith.constant 0 : i32
    %5 = arith.cmpi ne, %4, %c0_i32_1 : i32
    scf.if %5 {
      %c0_i32_2 = arith.constant 0 : i32
      %6 = arith.cmpi eq, %arg1, %c0_i32_2 : i32
      %7 = arith.extui %6 : i1 to i32
      %c0_i32_3 = arith.constant 0 : i32
      %8 = arith.cmpi ne, %7, %c0_i32_3 : i32
      scf.if %8 {
        %c0_14 = arith.constant 0 : index
        %c0_15 = arith.constant 0 : index
        %28 = vector.load %arg9[%c0_14, %c0_15] : memref<8x1xf32, #tpu.memory_space<vmem>>, vector<8x1xf32>
        %cst_16 = arith.constant 0.001953125 : f32
        %29 = vector.broadcast %cst_16 : f32 to vector<8x1xf32>
        %30 = arith.mulf %28, %29 : vector<8x1xf32>
        %c0_17 = arith.constant 0 : index
        %c0_18 = arith.constant 0 : index
        %31 = vector.load %arg10[%c0_17, %c0_18] : memref<8x1xf32, #tpu.memory_space<vmem>>, vector<8x1xf32>
        %cst_19 = arith.constant 0.001953125 : f32
        %32 = vector.broadcast %cst_19 : f32 to vector<8x1xf32>
        %33 = arith.mulf %31, %32 : vector<8x1xf32>
        %34 = arith.mulf %30, %30 : vector<8x1xf32>
        %35 = arith.subf %33, %34 : vector<8x1xf32>
        %cst_20 = arith.constant 0.000000e+00 : f32
        %36 = vector.broadcast %cst_20 : f32 to vector<8x1xf32>
        %37 = arith.maximumf %35, %36 : vector<8x1xf32>
        %c0_21 = arith.constant 0 : index
        %c0_22 = arith.constant 0 : index
        %38 = vector.load %arg4[%c0_21, %c0_22] : memref<8x1xf32, #tpu.memory_space<vmem>>, vector<8x1xf32>
        %cst_23 = arith.constant 9.99999974E-6 : f32
        %39 = vector.broadcast %cst_23 : f32 to vector<8x1xf32>
        %40 = arith.addf %37, %39 : vector<8x1xf32>
        %41 = math.rsqrt %40 : vector<8x1xf32>
        %42 = arith.mulf %38, %41 : vector<8x1xf32>
        %c0_24 = arith.constant 0 : index
        %c0_25 = arith.constant 0 : index
        %43 = vector.load %arg11[%c0_24, %c0_25] : memref<8x1xf32, #tpu.memory_space<vmem>>, vector<8x1xf32>
        tpu.vector_store %arg11[%c0_24, %c0_25], %42 {strides = array<i32>} : memref<8x1xf32, #tpu.memory_space<vmem>>, vector<8x1xf32>,
        %c0_26 = arith.constant 0 : index
        %c0_27 = arith.constant 0 : index
        %44 = vector.load %arg5[%c0_26, %c0_27] : memref<8x1xf32, #tpu.memory_space<vmem>>, vector<8x1xf32>
        %45 = arith.mulf %30, %42 : vector<8x1xf32>
        %46 = arith.subf %44, %45 : vector<8x1xf32>
        %c0_28 = arith.constant 0 : index
        %c0_29 = arith.constant 0 : index
        %47 = vector.load %arg12[%c0_28, %c0_29] : memref<8x1xf32, #tpu.memory_space<vmem>>, vector<8x1xf32>
        tpu.vector_store %arg12[%c0_28, %c0_29], %46 {strides = array<i32>} : memref<8x1xf32, #tpu.memory_space<vmem>>, vector<8x1xf32>,
      } else {
      }
      %9 = arith.index_cast %arg1 : i32 to index
      %c0 = arith.constant 0 : index
      %c0_4 = arith.constant 0 : index
      %10 = vector.load %arg8[%9, %c0, %c0_4] : memref<1x8x768xf32, #tpu.memory_space<vmem>>, vector<1x8x768xf32>
      %11 = vector.shape_cast %10 : vector<1x8x768xf32> to vector<8x768xf32>
      %c0_5 = arith.constant 0 : index
      %c0_6 = arith.constant 0 : index
      %12 = vector.load %arg11[%c0_5, %c0_6] : memref<8x1xf32, #tpu.memory_space<vmem>>, vector<8x1xf32>
      %13 = vector.broadcast %12 : vector<8x1xf32> to vector<8x768xf32>
      %14 = arith.mulf %11, %13 : vector<8x768xf32>
      %c0_7 = arith.constant 0 : index
      %c0_8 = arith.constant 0 : index
      %15 = vector.load %arg12[%c0_7, %c0_8] : memref<8x1xf32, #tpu.memory_space<vmem>>, vector<8x1xf32>
      %16 = vector.broadcast %15 : vector<8x1xf32> to vector<8x768xf32>
      %17 = arith.addf %14, %16 : vector<8x768xf32>
      %cst = arith.constant 0.000000e+00 : f32
      %18 = vector.broadcast %cst : f32 to vector<8x768xf32>
      %19 = arith.maximumf %17, %18 : vector<8x768xf32>
      %20 = vector.extract_strided_slice %19 {offsets = [0, 0], sizes = [8, 384], strides = [1, 1]} : vector<8x768xf32> to vector<8x384xf32>
      %c0_9 = arith.constant 0 : index
      %c0_10 = arith.constant 0 : index
      %c0_11 = arith.constant 0 : index
      %21 = vector.load %arg7[%c0_9, %c0_10, %c0_11] : memref<2x8x384xf32, #tpu.memory_space<vmem>>, vector<1x8x384xf32>
      %22 = vector.shape_cast %21 : vector<1x8x384xf32> to vector<8x384xf32>
      %23 = vector.shape_cast %20 : vector<8x384xf32> to vector<1x8x384xf32>
      tpu.vector_store %arg7[%c0_9, %c0_10, %c0_11], %23 {strides = array<i32>} : memref<2x8x384xf32, #tpu.memory_space<vmem>>, vector<1x8x384xf32>,
      %24 = vector.extract_strided_slice %19 {offsets = [0, 384], sizes = [8, 384], strides = [1, 1]} : vector<8x768xf32> to vector<8x384xf32>
      %c1 = arith.constant 1 : index
      %c0_12 = arith.constant 0 : index
      %c0_13 = arith.constant 0 : index
      %25 = vector.load %arg7[%c1, %c0_12, %c0_13] : memref<2x8x384xf32, #tpu.memory_space<vmem>>, vector<1x8x384xf32>
      %26 = vector.shape_cast %25 : vector<1x8x384xf32> to vector<8x384xf32>
      %27 = vector.shape_cast %24 : vector<8x384xf32> to vector<1x8x384xf32>
      tpu.vector_store %arg7[%c1, %c0_12, %c0_13], %27 {strides = array<i32>} : memref<2x8x384xf32, #tpu.memory_space<vmem>>, vector<1x8x384xf32>,
    } else {
    }
    return
  }
  func.func @transform_0(%arg0: i32, %arg1: i32) -> (i32, i32, i32) {
    %c1_i32 = arith.constant 1 : i32
    %0 = arith.subi %c1_i32, %arg0 : i32
    %1 = arith.muli %arg1, %0 : i32
    %c0_i32 = arith.constant 0 : i32
    %c0_i32_0 = arith.constant 0 : i32
    %c0_i32_1 = arith.constant 0 : i32
    return %1, %c0_i32, %c0_i32_0 : i32, i32, i32
  }
  func.func @transform_1(%arg0: i32, %arg1: i32) -> (i32, i32) {
    %c0_i32 = arith.constant 0 : i32
    %c0_i32_0 = arith.constant 0 : i32
    %c0_i32_1 = arith.constant 0 : i32
    return %c0_i32, %c0_i32_0 : i32, i32
  }
  func.func @transform_2(%arg0: i32, %arg1: i32) -> (i32, i32) {
    %c0_i32 = arith.constant 0 : i32
    %c0_i32_0 = arith.constant 0 : i32
    %c0_i32_1 = arith.constant 0 : i32
    return %c0_i32, %c0_i32_0 : i32, i32
  }
  func.func @transform_3(%arg0: i32, %arg1: i32) -> (i32, i32) {
    %c0_i32 = arith.constant 0 : i32
    %c0_i32_0 = arith.constant 0 : i32
    %c0_i32_1 = arith.constant 0 : i32
    return %c0_i32, %c0_i32_0 : i32, i32
  }
  func.func @transform_4(%arg0: i32, %arg1: i32) -> (i32, i32) {
    %c0_i32 = arith.constant 0 : i32
    %c0_i32_0 = arith.constant 0 : i32
    %c0_i32_1 = arith.constant 0 : i32
    return %c0_i32, %c0_i32_0 : i32, i32
  }
  func.func @transform_5(%arg0: i32, %arg1: i32) -> (i32, i32, i32) {
    %0 = arith.muli %arg1, %arg0 : i32
    %c0_i32 = arith.constant 0 : i32
    %c0_i32_0 = arith.constant 0 : i32
    %c0_i32_1 = arith.constant 0 : i32
    return %0, %c0_i32, %c0_i32_0 : i32, i32, i32
  }
}

</mosaic_0001>

<llo_original>
// kernel: tpu_custom_call.1
$region0: #{tpu_custom_call.1}
  #allocation0 [shape = 'u32[]', space=smem, size = 0x4, offset = 0x4, fixed_abs, tag = 'smem constant byte address 0x4 - core index']
  #allocation1 [shape = 'u32[144,128]{1,0:T(1,128)}', space=vmem, size = 0x12000, scoped, tag = 'internal scratch']
  #allocation2 [shape = 'f32[1,8,768]{2,1,0:T(8,128)}', space=vmem, size = 0x6000, scoped, tag = 'scratch operand']
  #allocation3 [shape = 'f32[8,1]{1,0:T(8,128)}', space=vmem, size = 0x1000, scoped, tag = 'scratch operand']
  #allocation4 [shape = 'f32[8,1]{1,0:T(8,128)}', space=vmem, size = 0x1000, scoped, tag = 'scratch operand']
  #allocation5 [shape = 'f32[8,1]{1,0:T(8,128)}', space=vmem, size = 0x1000, scoped, tag = 'scratch operand']
  #allocation6 [shape = 'f32[8,1]{1,0:T(8,128)}', space=vmem, size = 0x1000, scoped, tag = 'scratch operand']
  %s0 = inlined_call_operand.hbm [shape: f32[2,4,422], index: 0, kind: input, shape index: {}]
  %s1 = inlined_call_operand.vmem [shape: f32[8,36], index: 1, kind: input, shape index: {}]
  %s2 = inlined_call_operand.vmem [shape: f32[8,1], index: 2, kind: input, shape index: {}]
  %s3 = inlined_call_operand.vmem [shape: f32[8,1], index: 3, kind: input, shape index: {}]
  %s4 = inlined_call_operand.vmem [shape: f32[1,768], index: 4, kind: input, shape index: {}]
  %s5 = inlined_call_operand.hbm [shape: f32[2,8,384], index: 5, kind: output, shape index: {}]
  %s6 = sld [smem:[#allocation0]]
  $region73: #{tpu_custom_call.1} parent=0
    _
  %s8 = ssub.s32 1, %s6
  %s9 = scalar_select 0, %s8, %s6
  $region1: #{tpu_custom_call.1} parent=0
    #allocation7 [shape = 'u8[32768]{0}', space=vmem, size = 0x8000, scoped, tag = 'input window, operand 0']
    #allocation8 [shape = 's32[2]{0}', space=sflag, size = 0x8, scoped, tag = 'scoped memory for tpu_custom_call.1']
    #allocation9 [shape = 's32[2]{0}', space=sflag, size = 0x8, scoped, tag = 'scoped memory for tpu_custom_call.1']
    #allocation10 [shape = 'u8[49152]{0}', space=vmem, size = 0xc000, scoped, tag = 'output window, operand 0']
    %10 = vsyncpa [#allocation8], 0
    %s11 = scalar_lea.sflag [#allocation8], 1
    %12 = vsyncpa %s11, 0
    %13 = vsyncpa [#allocation9], 0
    %s14 = scalar_lea.sflag [#allocation9], 1
    %15 = vsyncpa %s14, 0
    loop: start=0, step=1, limit=4
    $region2: #{tpu_custom_call.1} parent=1 // loop_pre_header
      _
    $region3: #{tpu_custom_call.1} parent=1 // loop_header
      %s17 = sphi 0, %s21
      %p18 = scmp.ge.s32.totalorder %s17, 4
      %s24 = sphi 0, %s36
      %s25 = sphi 0, %s32
      %s26 = sphi 0, %s24
      %s27 = sphi 0, %s25
      %s28 = sphi 0, %s26
      %s29 = sphi 0, %s27
      %s43 = sphi 0, %s45
      %s46 = sphi 0, %s43
      %s47 = sphi 0, %s46
      %s63 = sphi 0, %s47
      %s67 = sphi 0, %s67
      %s69 = sphi 0, %s67
      %s70 = sphi 0, %s69
      %s84 = sphi 0, %s70
      %s88 = sphi 0, %s88
      %s90 = sphi 0, %s88
      %s91 = sphi 0, %s90
      %s105 = sphi 0, %s91
      %s109 = sphi 0, %s109
      %s111 = sphi 0, %s109
      %s112 = sphi 0, %s111
      %s126 = sphi 0, %s112
      %s130 = sphi 0, %s130
      %s132 = sphi 0, %s130
      %s133 = sphi 0, %s132
      %s147 = sphi 0, %s133
      %s155 = sphi 0, %s157
      %s158 = sphi 0, %s155
      %s159 = sphi 0, %s158
      %s175 = sphi 0, %s159
    $region4: #{tpu_custom_call.1} parent=1 // loop_header_branch
      %20 = sbr.rel (%p18) target = $region8
    $region5: #{tpu_custom_call.1} parent=1 // loop_body
      %s22 = ssub.s32 %s17, 1
      %s23 = ssub.s32 %s17, 2
      %s30 = sadd.s32 1, %s25
      %p31 = scmp.ge.s32.totalorder %s30, 1
      %s32 = scalar_select %p31, 0, %s30
      %s33 = sadd.s32 1, %s24
      %s34 = scalar_select %p31, %s33, %s24
      %p35 = scmp.ge.s32.totalorder %s34, 2
      %s36 = scalar_select %p35, 0, %s34
      %s37 = ssub.s32 1, %s24
      %s38 = smul.u32 %s25, %s37
      %s39 = ssub.s32 1, %s36
      %s40 = smul.u32 %s32, %s39
      %s41 = ssub.s32 %s38, %s40
      %p42 = scmp.eq.s32.totalorder %s41, 0
      %s44 = sadd.s32 %s43, 1
      %s45 = scalar_select %p42, %s43, %s44
      %p48 = pneg %p42
      %p49 = scmp.eq.s32.totalorder %s17, 1
      %p50 = por %p48, %p49
      %p51 = scmp.ne.s32.totalorder %s43, %s46
      %p52 = scmp.eq.s32.totalorder %s17, 0
      %p53 = por %p51, %p52
      %p54 = scmp.ne.s32.totalorder %s43, %s46
      %p55 = scmp.eq.s32.totalorder %s22, 1
      %p56 = por %p54, %p55
      %p57 = scmp.ne.s32.totalorder %s46, %s47
      %p58 = scmp.eq.s32.totalorder %s22, 0
      %p59 = por %p57, %p58
      %p60 = scmp.ne.s32.totalorder %s46, %s47
      %p61 = scmp.eq.s32.totalorder %s23, 1
      %p62 = por %p60, %p61
      %p64 = scmp.ne.s32.totalorder %s47, %s63
      %p65 = scmp.eq.s32.totalorder %s23, 0
      %p66 = por %p64, %p65
      %s68 = sadd.s32 %s67, 1
      %p71 = scmp.eq.s32.totalorder %s17, 1
      %p72 = scmp.ne.s32.totalorder %s67, %s69
      %p73 = scmp.eq.s32.totalorder %s17, 0
      %p74 = por %p72, %p73
      %p75 = scmp.ne.s32.totalorder %s67, %s69
      %p76 = scmp.eq.s32.totalorder %s22, 1
      %p77 = por %p75, %p76
      %p78 = scmp.ne.s32.totalorder %s69, %s70
      %p79 = scmp.eq.s32.totalorder %s22, 0
      %p80 = por %p78, %p79
      %p81 = scmp.ne.s32.totalorder %s69, %s70
      %p82 = scmp.eq.s32.totalorder %s23, 1
      %p83 = por %p81, %p82
      %p85 = scmp.ne.s32.totalorder %s70, %s84
      %p86 = scmp.eq.s32.totalorder %s23, 0
      %p87 = por %p85, %p86
      %s89 = sadd.s32 %s88, 1
      %p92 = scmp.eq.s32.totalorder %s17, 1
      %p93 = scmp.ne.s32.totalorder %s88, %s90
      %p94 = scmp.eq.s32.totalorder %s17, 0
      %p95 = por %p93, %p94
      %p96 = scmp.ne.s32.totalorder %s88, %s90
      %p97 = scmp.eq.s32.totalorder %s22, 1
      %p98 = por %p96, %p97
      %p99 = scmp.ne.s32.totalorder %s90, %s91
      %p100 = scmp.eq.s32.totalorder %s22, 0
      %p101 = por %p99, %p100
      %p102 = scmp.ne.s32.totalorder %s90, %s91
      %p103 = scmp.eq.s32.totalorder %s23, 1
      %p104 = por %p102, %p103
      %p106 = scmp.ne.s32.totalorder %s91, %s105
      %p107 = scmp.eq.s32.totalorder %s23, 0
      %p108 = por %p106, %p107
      %s110 = sadd.s32 %s109, 1
      %p113 = scmp.eq.s32.totalorder %s17, 1
      %p114 = scmp.ne.s32.totalorder %s109, %s111
      %p115 = scmp.eq.s32.totalorder %s17, 0
      %p116 = por %p114, %p115
      %p117 = scmp.ne.s32.totalorder %s109, %s111
      %p118 = scmp.eq.s32.totalorder %s22, 1
      %p119 = por %p117, %p118
      %p120 = scmp.ne.s32.totalorder %s111, %s112
      %p121 = scmp.eq.s32.totalorder %s22, 0
      %p122 = por %p120, %p121
      %p123 = scmp.ne.s32.totalorder %s111, %s112
      %p124 = scmp.eq.s32.totalorder %s23, 1
      %p125 = por %p123, %p124
      %p127 = scmp.ne.s32.totalorder %s112, %s126
      %p128 = scmp.eq.s32.totalorder %s23, 0
      %p129 = por %p127, %p128
      %s131 = sadd.s32 %s130, 1
      %p134 = scmp.eq.s32.totalorder %s17, 1
      %p135 = scmp.ne.s32.totalorder %s130, %s132
      %p136 = scmp.eq.s32.totalorder %s17, 0
      %p137 = por %p135, %p136
      %p138 = scmp.ne.s32.totalorder %s130, %s132
      %p139 = scmp.eq.s32.totalorder %s22, 1
      %p140 = por %p138, %p139
      %p141 = scmp.ne.s32.totalorder %s132, %s133
      %p142 = scmp.eq.s32.totalorder %s22, 0
      %p143 = por %p141, %p142
      %p144 = scmp.ne.s32.totalorder %s132, %s133
      %p145 = scmp.eq.s32.totalorder %s23, 1
      %p146 = por %p144, %p145
      %p148 = scmp.ne.s32.totalorder %s133, %s147
      %p149 = scmp.eq.s32.totalorder %s23, 0
      %p150 = por %p148, %p149
      %s151 = smul.u32 %s25, %s24
      %s152 = smul.u32 %s32, %s36
      %s153 = ssub.s32 %s151, %s152
      %p154 = scmp.eq.s32.totalorder %s153, 0
      %s156 = sadd.s32 %s155, 1
      %s157 = scalar_select %p154, %s155, %s156
      %p160 = pneg %p154
      %p161 = scmp.eq.s32.totalorder %s17, 1
      %p162 = por %p160, %p161
      %p163 = scmp.ne.s32.totalorder %s155, %s158
      %p164 = scmp.eq.s32.totalorder %s17, 0
      %p165 = por %p163, %p164
      %p166 = scmp.ne.s32.totalorder %s155, %s158
      %p167 = scmp.eq.s32.totalorder %s22, 1
      %p168 = por %p166, %p167
      %p169 = scmp.ne.s32.totalorder %s158, %s159
      %p170 = scmp.eq.s32.totalorder %s22, 0
      %p171 = por %p169, %p170
      %p172 = scmp.ne.s32.totalorder %s158, %s159
      %p173 = scmp.eq.s32.totalorder %s23, 1
      %p174 = por %p172, %p173
      %p176 = scmp.ne.s32.totalorder %s159, %s175
      %p177 = scmp.eq.s32.totalorder %s23, 0
      %p178 = por %p176, %p177
      %p179 = scmp.le.s32.totalorder 1, %s17
      %p180 = scmp.lt.s32.totalorder %s17, 3
      %p181 = pnand %p179, %p180
      %p182 = pneg %p181
      // Predicated region
      $region9: #{tpu_custom_call.1} parent=5 // pred_check
        _
      $region10: #{tpu_custom_call.1} parent=5 // pred_check_branch
        %184 = sbr.rel (%p181) target = $region12
      $region11: #{tpu_custom_call.1} parent=5 // pred_region
        %s185 = ssub.s32 %s17, 1
        // Predicated region
        $region13: #{tpu_custom_call.1} parent=11 // pred_check
          %p186 = pneg %p80
        $region14: #{tpu_custom_call.1} parent=11 // pred_check_branch
          %188 = sbr.rel (%p186) target = $region16
        $region15: #{tpu_custom_call.1} parent=11 // pred_region
          _
        $region16: #{tpu_custom_call.1} parent=11 // pred_fallthru
          _
        // Predicated region
        $region17: #{tpu_custom_call.1} parent=11 // pred_check
          %p189 = pneg %p101
        $region18: #{tpu_custom_call.1} parent=11 // pred_check_branch
          %191 = sbr.rel (%p189) target = $region20
        $region19: #{tpu_custom_call.1} parent=11 // pred_region
          _
        $region20: #{tpu_custom_call.1} parent=11 // pred_fallthru
          _
        // Predicated region
        $region21: #{tpu_custom_call.1} parent=11 // pred_check
          %p192 = pneg %p122
        $region22: #{tpu_custom_call.1} parent=11 // pred_check_branch
          %194 = sbr.rel (%p192) target = $region24
        $region23: #{tpu_custom_call.1} parent=11 // pred_region
          _
        $region24: #{tpu_custom_call.1} parent=11 // pred_fallthru
          _
        // Predicated region
        $region25: #{tpu_custom_call.1} parent=11 // pred_check
          %p195 = pneg %p143
        $region26: #{tpu_custom_call.1} parent=11 // pred_check_branch
          %197 = sbr.rel (%p195) target = $region28
        $region27: #{tpu_custom_call.1} parent=11 // pred_region
          _
        $region28: #{tpu_custom_call.1} parent=11 // pred_fallthru
          _
      $region12: #{tpu_custom_call.1} parent=5 // pred_fallthru
        _
      %p198 = scmp.lt.s32.totalorder %s17, 2
      // Predicated region
      $region29: #{tpu_custom_call.1} parent=5 // pred_check
        %p199 = pneg %p198
      $region30: #{tpu_custom_call.1} parent=5 // pred_check_branch
        %201 = sbr.rel (%p199) target = $region32
      $region31: #{tpu_custom_call.1} parent=5 // pred_region
        // Predicated region
        $region33: #{tpu_custom_call.1} parent=31 // pred_check
          %p202 = pneg %p53
        $region34: #{tpu_custom_call.1} parent=31 // pred_check_branch
          %204 = sbr.rel (%p202) target = $region36
        $region35: #{tpu_custom_call.1} parent=31 // pred_region
          %s205 = sand.u32 %s43, 1
          %s206 = scalar_lea.sflag [#allocation8], %s205
          %s207 = sand.u32 %s43, 1
          %s208 = smul.addr %s207, 32
          %s209 = scalar_lea.vmem [#allocation7], %s208
          %s210 = ssub.s32 1, %s24
          %s211 = smul.u32 %s25, %s210
          %s212 = smul.u32 2, %s211
          %s214 = ssub.s32 512, 512
          %215 = vsyncadd %s206, %s214
          %s216 = smul.addr %s212, 4
          %s217 = smul.addr %s216, 64
          %s218 = scalar_lea.hbm %s0, %s217
          %s219 = sshll.u32 %s209, 4
          %s220 = int_to_ptr.vmem [resolvable:$true] %s219
          %225 = dma.hbm_to_vmem [thread:$0]  %s218, 512, %s220, %s206, 256, 256, 16
        $region36: #{tpu_custom_call.1} parent=31 // pred_fallthru
          _
      $region32: #{tpu_custom_call.1} parent=5 // pred_fallthru
        _
      %p226 = scmp.le.s32.totalorder 1, %s17
      %p227 = scmp.lt.s32.totalorder %s17, 3
      %p228 = pnand %p226, %p227
      %p229 = pneg %p228
      // Predicated region
      $region37: #{tpu_custom_call.1} parent=5 // pred_check
        _
      $region38: #{tpu_custom_call.1} parent=5 // pred_check_branch
        %231 = sbr.rel (%p228) target = $region40
      $region39: #{tpu_custom_call.1} parent=5 // pred_region
        %s232 = ssub.s32 %s17, 1
        %s233 = sand.u32 %s46, 1
        %s234 = scalar_lea.sflag [#allocation8], %s233
        %s235 = sand.u32 %s46, 1
        %s236 = smul.addr %s235, 32
        %s237 = scalar_lea.vmem [#allocation7], %s236
        // Predicated region
        $region41: #{tpu_custom_call.1} parent=39 // pred_check
          %p238 = pneg %p59
        $region42: #{tpu_custom_call.1} parent=39 // pred_check_branch
          %240 = sbr.rel (%p238) target = $region44
        $region43: #{tpu_custom_call.1} parent=39 // pred_region
          %241 = dma.done %s234, 512
        $region44: #{tpu_custom_call.1} parent=39 // pred_fallthru
          _
        %s242 = sand.u32 %s46, 1
        %s243 = scalar_lea.sflag [#allocation8], %s242
        %s244 = sand.u32 %s46, 1
        %s245 = smul.addr %s244, 32
        %s246 = scalar_lea.vmem [#allocation7], %s245
        %p247 = pneg %p59
        %p248 = pneg %p56
        %p249 = pneg %p80
        %p250 = pneg %p77
        %p251 = pneg %p101
        %p252 = pneg %p98
        %p253 = pneg %p122
        %p254 = pneg %p119
        %p255 = pneg %p143
        %p256 = pneg %p140
        %p257 = pneg %p171
        %p258 = pneg %p168
        %s259 = sand.u32 %s158, 1
        %s260 = scalar_lea.sflag [#allocation9], %s259
        %s261 = sand.u32 %s158, 1
        %s262 = smul.addr %s261, 48
        %s263 = scalar_lea.vmem [#allocation10], %s262
        %s264 = ssub.s32 1, %s26
        %s265 = smul.u32 %s27, %s264
        %s266 = smul.u32 2, %s265
        %s267 = smul.u32 %s27, %s26
        %s268 = smul.u32 2, %s267
        %p269 = scmp.eq.s32.totalorder %s26, 0
        // Predicated region
        $region45: #{tpu_custom_call.1} parent=39 // pred_check
          %p270 = pneg %p269
        $region46: #{tpu_custom_call.1} parent=39 // pred_check_branch
          %272 = sbr.rel (%p270) target = $region48
        $region47: #{tpu_custom_call.1} parent=39 // pred_region
          %p273 = scmp.eq.s32.totalorder %s27, 0
          // Predicated region
          $region49: #{tpu_custom_call.1} parent=47 // pred_check
            %p274 = pneg %p273
          $region50: #{tpu_custom_call.1} parent=47 // pred_check_branch
            %276 = sbr.rel (%p274) target = $region52
          $region51: #{tpu_custom_call.1} parent=47 // pred_region
            %vm277 = vcmask 7168
            %278 = vst.msk [vmem:[#allocation3] sm:$0xff] %vm277, 0.0
            %279 = vst.msk [vmem:[#allocation4] sm:$0xff] %vm277, 0.0
          $region52: #{tpu_custom_call.1} parent=47 // pred_fallthru
            _
          %v280 = vld [vmem:[%s237] sm:$0xff]
          %v281 = vld [vmem:[%s237 + $0x8] sm:$0xf]
          %v282 = vld [vmem:[%s237 + $0x8] sm:$0xff]
          %v284 = vcombine.high %v280, %v280
          %v287 = vcombine.low %v280, %v280
          %v288 = vcombine.low %v282, %v282
          %289 = vrot.lane.b32.xlu0 %v287, 127
          %v290 = vpop.permute.xlu0 %289
          %291 = vrot.lane.b32.xlu0 %v280, 127
          %v292 = vpop.permute.xlu0 %291
          %293 = vrot.lane.b32.xlu0 %v288, 127
          %v294 = vpop.permute.xlu0 %293
          %295 = vrot.lane.b32.xlu0 %v282, 127
          %v296 = vpop.permute.xlu0 %295
          %vm297 = vcmask 1039360
          %v298 = vsel %vm297, %v290, %v292
          %v299 = vsel %vm297, %v292, %v294
          %v300 = vsel %vm297, %v294, %v296
          %v304 = vcombine.high %v282, %v282
          %305 = vrot.lane.b32.xlu0 %v280, 126
          %v306 = vpop.permute.xlu0 %305
          %307 = vrot.lane.b32.xlu0 %v284, 126
          %v308 = vpop.permute.xlu0 %307
          %309 = vrot.lane.b32.xlu0 %v282, 126
          %v310 = vpop.permute.xlu0 %309
          %311 = vrot.lane.b32.xlu0 %v304, 126
          %v312 = vpop.permute.xlu0 %311
          %vm313 = vcmask 1031168
          %v314 = vsel %vm313, %v306, %v308
          %v315 = vsel %vm313, %v308, %v310
          %v316 = vsel %vm313, %v310, %v312
          %320 = vrot.lane.b32.xlu0 %v287, 110
          %v321 = vpop.permute.xlu0 %320
          %322 = vrot.lane.b32.xlu0 %v280, 110
          %v323 = vpop.permute.xlu0 %322
          %324 = vrot.lane.b32.xlu0 %v288, 110
          %v325 = vpop.permute.xlu0 %324
          %326 = vrot.lane.b32.xlu0 %v282, 110
          %v327 = vpop.permute.xlu0 %326
          %vm328 = vcmask 900096
          %v329 = vsel %vm328, %v321, %v323
          %v330 = vsel %vm328, %v323, %v325
          %v331 = vsel %vm328, %v325, %v327
          %335 = vrot.lane.b32.xlu0 %v280, 109
          %v336 = vpop.permute.xlu0 %335
          %337 = vrot.lane.b32.xlu0 %v284, 109
          %v338 = vpop.permute.xlu0 %337
          %339 = vrot.lane.b32.xlu0 %v282, 109
          %v340 = vpop.permute.xlu0 %339
          %341 = vrot.lane.b32.xlu0 %v304, 109
          %v342 = vpop.permute.xlu0 %341
          %vm343 = vcmask 891904
          %v344 = vsel %vm343, %v336, %v338
          %v345 = vsel %vm343, %v338, %v340
          %v346 = vsel %vm343, %v340, %v342
          %350 = vrot.lane.b32.xlu0 %v287, 108
          %v351 = vpop.permute.xlu0 %350
          %352 = vrot.lane.b32.xlu0 %v280, 108
          %v353 = vpop.permute.xlu0 %352
          %354 = vrot.lane.b32.xlu0 %v288, 108
          %v355 = vpop.permute.xlu0 %354
          %356 = vrot.lane.b32.xlu0 %v282, 108
          %v357 = vpop.permute.xlu0 %356
          %vm358 = vcmask 883712
          %v359 = vsel %vm358, %v351, %v353
          %v360 = vsel %vm358, %v353, %v355
          %v361 = vsel %vm358, %v355, %v357
          %365 = vrot.lane.b32.xlu0 %v280, 92
          %v366 = vpop.permute.xlu0 %365
          %367 = vrot.lane.b32.xlu0 %v284, 92
          %v368 = vpop.permute.xlu0 %367
          %369 = vrot.lane.b32.xlu0 %v282, 92
          %v370 = vpop.permute.xlu0 %369
          %371 = vrot.lane.b32.xlu0 %v304, 92
          %v372 = vpop.permute.xlu0 %371
          %vm373 = vcmask 752640
          %v374 = vsel %vm373, %v366, %v368
          %v375 = vsel %vm373, %v368, %v370
          %v376 = vsel %vm373, %v370, %v372
          %380 = vrot.lane.b32.xlu0 %v287, 91
          %v381 = vpop.permute.xlu0 %380
          %382 = vrot.lane.b32.xlu0 %v280, 91
          %v383 = vpop.permute.xlu0 %382
          %384 = vrot.lane.b32.xlu0 %v288, 91
          %v385 = vpop.permute.xlu0 %384
          %386 = vrot.lane.b32.xlu0 %v282, 91
          %v387 = vpop.permute.xlu0 %386
          %vm388 = vcmask 744448
          %v389 = vsel %vm388, %v381, %v383
          %v390 = vsel %vm388, %v383, %v385
          %v391 = vsel %vm388, %v385, %v387
          %395 = vrot.lane.b32.xlu0 %v280, 90
          %v396 = vpop.permute.xlu0 %395
          %397 = vrot.lane.b32.xlu0 %v284, 90
          %v398 = vpop.permute.xlu0 %397
          %399 = vrot.lane.b32.xlu0 %v282, 90
          %v400 = vpop.permute.xlu0 %399
          %401 = vrot.lane.b32.xlu0 %v304, 90
          %v402 = vpop.permute.xlu0 %401
          %vm403 = vcmask 736256
          %v404 = vsel %vm403, %v396, %v398
          %v405 = vsel %vm403, %v398, %v400
          %v406 = vsel %vm403, %v400, %v402
          %vm407 = vcmask 1043456
          %v408 = vsel %vm407, %v280, %v298
          %v409 = vsel %vm407, %v284, %v299
          %v410 = vsel %vm407, %v281, %v300
          %v411 = vsel %vm407, %v314, %v329
          %v412 = vsel %vm407, %v315, %v330
          %v413 = vsel %vm407, %v316, %v331
          %v414 = vsel %vm407, %v344, %v359
          %v415 = vsel %vm407, %v345, %v360
          %v416 = vsel %vm407, %v346, %v361
          %v417 = vsel %vm407, %v374, %v389
          %v418 = vsel %vm407, %v375, %v390
          %v419 = vsel %vm407, %v376, %v391
          %s420 = scalar_lea.vmem %s237, 16 [#allocation7]
          %v421 = vld [vmem:[%s420] sm:$0xff]
          %v422 = vld [vmem:[%s420 + $0x8] sm:$0xf]
          %v423 = vld [vmem:[%s420 + $0x8] sm:$0xff]
          %v425 = vcombine.high %v421, %v421
          %v428 = vcombine.low %v421, %v421
          %v429 = vcombine.low %v423, %v423
          %430 = vrot.lane.b32.xlu0 %v428, 127
          %v431 = vpop.permute.xlu0 %430
          %432 = vrot.lane.b32.xlu0 %v421, 127
          %v433 = vpop.permute.xlu0 %432
          %434 = vrot.lane.b32.xlu0 %v429, 127
          %v435 = vpop.permute.xlu0 %434
          %436 = vrot.lane.b32.xlu0 %v423, 127
          %v437 = vpop.permute.xlu0 %436
          %v438 = vsel %vm297, %v431, %v433
          %v439 = vsel %vm297, %v433, %v435
          %v440 = vsel %vm297, %v435, %v437
          %v444 = vcombine.high %v423, %v423
          %445 = vrot.lane.b32.xlu0 %v421, 126
          %v446 = vpop.permute.xlu0 %445
          %447 = vrot.lane.b32.xlu0 %v425, 126
          %v448 = vpop.permute.xlu0 %447
          %449 = vrot.lane.b32.xlu0 %v423, 126
          %v450 = vpop.permute.xlu0 %449
          %451 = vrot.lane.b32.xlu0 %v444, 126
          %v452 = vpop.permute.xlu0 %451
          %v453 = vsel %vm313, %v446, %v448
          %v454 = vsel %vm313, %v448, %v450
          %v455 = vsel %vm313, %v450, %v452
          %459 = vrot.lane.b32.xlu0 %v428, 110
          %v460 = vpop.permute.xlu0 %459
          %461 = vrot.lane.b32.xlu0 %v421, 110
          %v462 = vpop.permute.xlu0 %461
          %463 = vrot.lane.b32.xlu0 %v429, 110
          %v464 = vpop.permute.xlu0 %463
          %465 = vrot.lane.b32.xlu0 %v423, 110
          %v466 = vpop.permute.xlu0 %465
          %v467 = vsel %vm328, %v460, %v462
          %v468 = vsel %vm328, %v462, %v464
          %v469 = vsel %vm328, %v464, %v466
          %473 = vrot.lane.b32.xlu0 %v421, 109
          %v474 = vpop.permute.xlu0 %473
          %475 = vrot.lane.b32.xlu0 %v425, 109
          %v476 = vpop.permute.xlu0 %475
          %477 = vrot.lane.b32.xlu0 %v423, 109
          %v478 = vpop.permute.xlu0 %477
          %479 = vrot.lane.b32.xlu0 %v444, 109
          %v480 = vpop.permute.xlu0 %479
          %v481 = vsel %vm343, %v474, %v476
          %v482 = vsel %vm343, %v476, %v478
          %v483 = vsel %vm343, %v478, %v480
          %487 = vrot.lane.b32.xlu0 %v428, 108
          %v488 = vpop.permute.xlu0 %487
          %489 = vrot.lane.b32.xlu0 %v421, 108
          %v490 = vpop.permute.xlu0 %489
          %491 = vrot.lane.b32.xlu0 %v429, 108
          %v492 = vpop.permute.xlu0 %491
          %493 = vrot.lane.b32.xlu0 %v423, 108
          %v494 = vpop.permute.xlu0 %493
          %v495 = vsel %vm358, %v488, %v490
          %v496 = vsel %vm358, %v490, %v492
          %v497 = vsel %vm358, %v492, %v494
          %501 = vrot.lane.b32.xlu0 %v421, 92
          %v502 = vpop.permute.xlu0 %501
          %503 = vrot.lane.b32.xlu0 %v425, 92
          %v504 = vpop.permute.xlu0 %503
          %505 = vrot.lane.b32.xlu0 %v423, 92
          %v506 = vpop.permute.xlu0 %505
          %507 = vrot.lane.b32.xlu0 %v444, 92
          %v508 = vpop.permute.xlu0 %507
          %v509 = vsel %vm373, %v502, %v504
          %v510 = vsel %vm373, %v504, %v506
          %v511 = vsel %vm373, %v506, %v508
          %515 = vrot.lane.b32.xlu0 %v428, 91
          %v516 = vpop.permute.xlu0 %515
          %517 = vrot.lane.b32.xlu0 %v421, 91
          %v518 = vpop.permute.xlu0 %517
          %519 = vrot.lane.b32.xlu0 %v429, 91
          %v520 = vpop.permute.xlu0 %519
          %521 = vrot.lane.b32.xlu0 %v423, 91
          %v522 = vpop.permute.xlu0 %521
          %v523 = vsel %vm388, %v516, %v518
          %v524 = vsel %vm388, %v518, %v520
          %v525 = vsel %vm388, %v520, %v522
          %529 = vrot.lane.b32.xlu0 %v421, 90
          %v530 = vpop.permute.xlu0 %529
          %531 = vrot.lane.b32.xlu0 %v425, 90
          %v532 = vpop.permute.xlu0 %531
          %533 = vrot.lane.b32.xlu0 %v423, 90
          %v534 = vpop.permute.xlu0 %533
          %535 = vrot.lane.b32.xlu0 %v444, 90
          %v536 = vpop.permute.xlu0 %535
          %v537 = vsel %vm403, %v530, %v532
          %v538 = vsel %vm403, %v532, %v534
          %v539 = vsel %vm403, %v534, %v536
          %v540 = vsel %vm407, %v421, %v438
          %v541 = vsel %vm407, %v425, %v439
          %v542 = vsel %vm407, %v422, %v440
          %v543 = vsel %vm407, %v453, %v467
          %v544 = vsel %vm407, %v454, %v468
          %v545 = vsel %vm407, %v455, %v469
          %v546 = vsel %vm407, %v481, %v495
          %v547 = vsel %vm407, %v482, %v496
          %v548 = vsel %vm407, %v483, %v497
          %v549 = vsel %vm407, %v509, %v523
          %v550 = vsel %vm407, %v510, %v524
          %v551 = vsel %vm407, %v511, %v525
          %v552 = vld [vmem:[%s1] sm:$0xff]
          %vm553 = vcmask 293888
          %v555 = vsel %vm553, %v552, 0
          %v557 = vsel %vm407, %v404, 0
          %v559 = vsel %vm407, %v405, 0
          %v561 = vsel %vm407, %v406, 0
          %v563 = vsel %vm407, %v537, 0
          %v565 = vsel %vm407, %v538, 0
          %v567 = vsel %vm407, %v539, 0
          %569 = vmatprep.subr.mxu0 %v409
          %570 = vmatpush1.msra.mxu0 %v408
          %571 = vmatprep.subr.mxu0 %v412
          %572 = vmatpush1.msra.mxu0 %v411
          %573 = vmatprep.subr.mxu0 %v415
          %574 = vmatpush1.msra.mxu0 %v414
          %575 = vmatprep.subr.mxu0 %v418
          %576 = vmatpush1.msra.mxu0 %v417
          %577 = vmatprep.subr.mxu0 %v559
          %578 = vmatpush1.msra.mxu0 %v557
          %579 = vmatprep.subr.mxu0 0.0
          %580 = vmatpush1.msra.mxu0 0.0
          %581 = vmatprep.subr.mxu0 0.0
          %582 = vmatpush1.msra.mxu0 0.0
          %583 = vmatprep.subr.mxu0 0.0
          %584 = vmatpush1.msra.mxu0 0.0
          %585 = vmatprep.subr.mxu0 0.0
          %586 = vmatpush1.msra.mxu0 0.0
          %587 = vmatprep.subr.mxu0 0.0
          %588 = vmatpush1.msra.mxu0 0.0
          %589 = vmatprep.subr.mxu0 0.0
          %590 = vmatpush1.msra.mxu0 0.0
          %591 = vmatprep.subr.mxu0 0.0
          %592 = vmatpush1.msra.mxu0 0.0
          %593 = vmatprep.subr.mxu0 0.0
          %594 = vmatpush1.msra.mxu0 0.0
          %595 = vmatprep.subr.mxu0 0.0
          %596 = vmatpush1.msra.mxu0 0.0
          %597 = vmatprep.subr.mxu0 0.0
          %598 = vmatpush1.msra.mxu0 0.0
          %599 = vmatprep.subr.mxu0 0.0
          %600 = vmatpush1.msra.mxu0 0.0
          %601 = vmatprep.subr.mxu0 0.0
          %602 = vmatpush1.msra.mxu0 0.0
          %603 = vmatprep.subr.mxu0 0.0
          %604 = vmatpush1.msra.mxu0 0.0
          %605 = vmatprep.subr.mxu0 0.0
          %606 = vmatpush1.msra.mxu0 0.0
          %607 = vmatprep.subr.mxu0 0.0
          %608 = vmatpush1.msra.mxu0 0.0
          %609 = vmatprep.subr.mxu0 0.0
          %610 = vmatpush1.msra.mxu0 0.0
          %611 = vmatprep.subr.mxu0 0.0
          %612 = vmatpush1.msra.mxu0 0.0
          %613 = vmatprep.subr.mxu0 0.0
          %614 = vmatpush1.msra.mxu0 0.0
          %615 = vmatprep.subr.mxu0 0.0
          %616 = vmatpush1.msra.mxu0 0.0
          %617 = vmatprep.subr.mxu0 0.0
          %618 = vmatpush1.msra.mxu0 0.0
          %619 = vmatprep.subr.mxu0 0.0
          %620 = vmatpush1.msra.mxu0 0.0
          %621 = vmatprep.subr.mxu0 0.0
          %622 = vmatpush1.msra.mxu0 0.0
          %623 = vmatprep.subr.mxu0 0.0
          %624 = vmatpush1.msra.mxu0 0.0
          %625 = vmatprep.subr.mxu0 0.0
          %626 = vmatpush1.msra.mxu0 0.0
          %627 = vmatprep.subr.mxu0 0.0
          %628 = vmatpush1.msra.mxu0 0.0
          %629 = vmatprep.subr.mxu0 0.0
          %630 = vmatpush1.msra.mxu0 0.0
          %631 = vmatprep.subr.mxu0 0.0
          %632 = vmatpush1.msra.mxu0 0.0
          %633 = vmatprep.mubr.f32.mxu0 0.0
          %634 = vmatmul.mubr.f32.gmra.mrb[0].mxu0 %v555
          %v635 = vpop.f32.mrb[0].mxu0
          %v636 = vadd.f32 0.0, %v635
          %v637 = vpop.f32.mrb[0].mxu0
          %v638 = vadd.f32 0.0, %v637
          %639 = vdwg.mxu0
          %640 = vmatprep.subr.mxu0 %v540
          %641 = vmatpush1.msra.mxu0 %v410
          %642 = vmatprep.subr.mxu0 %v543
          %643 = vmatpush1.msra.mxu0 %v413
          %644 = vmatprep.subr.mxu0 %v546
          %645 = vmatpush1.msra.mxu0 %v416
          %646 = vmatprep.subr.mxu0 %v549
          %647 = vmatpush1.msra.mxu0 %v419
          %648 = vmatprep.subr.mxu0 %v563
          %649 = vmatpush1.msra.mxu0 %v561
          %650 = vmatprep.subr.mxu0 0.0
          %651 = vmatpush1.msra.mxu0 0.0
          %652 = vmatprep.subr.mxu0 0.0
          %653 = vmatpush1.msra.mxu0 0.0
          %654 = vmatprep.subr.mxu0 0.0
          %655 = vmatpush1.msra.mxu0 0.0
          %656 = vmatprep.subr.mxu0 0.0
          %657 = vmatpush1.msra.mxu0 0.0
          %658 = vmatprep.subr.mxu0 0.0
          %659 = vmatpush1.msra.mxu0 0.0
          %660 = vmatprep.subr.mxu0 0.0
          %661 = vmatpush1.msra.mxu0 0.0
          %662 = vmatprep.subr.mxu0 0.0
          %663 = vmatpush1.msra.mxu0 0.0
          %664 = vmatprep.subr.mxu0 0.0
          %665 = vmatpush1.msra.mxu0 0.0
          %666 = vmatprep.subr.mxu0 0.0
          %667 = vmatpush1.msra.mxu0 0.0
          %668 = vmatprep.subr.mxu0 0.0
          %669 = vmatpush1.msra.mxu0 0.0
          %670 = vmatprep.subr.mxu0 0.0
          %671 = vmatpush1.msra.mxu0 0.0
          %672 = vmatprep.subr.mxu0 0.0
          %673 = vmatpush1.msra.mxu0 0.0
          %674 = vmatprep.subr.mxu0 0.0
          %675 = vmatpush1.msra.mxu0 0.0
          %676 = vmatprep.subr.mxu0 0.0
          %677 = vmatpush1.msra.mxu0 0.0
          %678 = vmatprep.subr.mxu0 0.0
          %679 = vmatpush1.msra.mxu0 0.0
          %680 = vmatprep.subr.mxu0 0.0
          %681 = vmatpush1.msra.mxu0 0.0
          %682 = vmatprep.subr.mxu0 0.0
          %683 = vmatpush1.msra.mxu0 0.0
          %684 = vmatprep.subr.mxu0 0.0
          %685 = vmatpush1.msra.mxu0 0.0
          %686 = vmatprep.subr.mxu0 0.0
          %687 = vmatpush1.msra.mxu0 0.0
          %688 = vmatprep.subr.mxu0 0.0
          %689 = vmatpush1.msra.mxu0 0.0
          %690 = vmatprep.subr.mxu0 0.0
          %691 = vmatpush1.msra.mxu0 0.0
          %692 = vmatprep.subr.mxu0 0.0
          %693 = vmatpush1.msra.mxu0 0.0
          %694 = vmatprep.subr.mxu0 0.0
          %695 = vmatpush1.msra.mxu0 0.0
          %696 = vmatprep.subr.mxu0 0.0
          %697 = vmatpush1.msra.mxu0 0.0
          %698 = vmatprep.subr.mxu0 0.0
          %699 = vmatpush1.msra.mxu0 0.0
          %700 = vmatprep.subr.mxu0 0.0
          %701 = vmatpush1.msra.mxu0 0.0
          %702 = vmatprep.subr.mxu0 0.0
          %703 = vmatpush1.msra.mxu0 0.0
          %704 = vmatprep.mubr.f32.mxu0 0.0
          %705 = vmatmul.mubr.f32.gmra.mrb[0].mxu0 %v555
          %v706 = vpop.f32.mrb[0].mxu0
          %v707 = vadd.f32 0.0, %v706
          %v708 = vpop.f32.mrb[0].mxu0
          %v709 = vadd.f32 0.0, %v708
          %710 = vdwg.mxu0
          %711 = vmatprep.subr.mxu0 %v542
          %712 = vmatpush1.msra.mxu0 %v541
          %713 = vmatprep.subr.mxu0 %v545
          %714 = vmatpush1.msra.mxu0 %v544
          %715 = vmatprep.subr.mxu0 %v548
          %716 = vmatpush1.msra.mxu0 %v547
          %717 = vmatprep.subr.mxu0 %v551
          %718 = vmatpush1.msra.mxu0 %v550
          %719 = vmatprep.subr.mxu0 %v567
          %720 = vmatpush1.msra.mxu0 %v565
          %721 = vmatprep.subr.mxu0 0.0
          %722 = vmatpush1.msra.mxu0 0.0
          %723 = vmatprep.subr.mxu0 0.0
          %724 = vmatpush1.msra.mxu0 0.0
          %725 = vmatprep.subr.mxu0 0.0
          %726 = vmatpush1.msra.mxu0 0.0
          %727 = vmatprep.subr.mxu0 0.0
          %728 = vmatpush1.msra.mxu0 0.0
          %729 = vmatprep.subr.mxu0 0.0
          %730 = vmatpush1.msra.mxu0 0.0
          %731 = vmatprep.subr.mxu0 0.0
          %732 = vmatpush1.msra.mxu0 0.0
          %733 = vmatprep.subr.mxu0 0.0
          %734 = vmatpush1.msra.mxu0 0.0
          %735 = vmatprep.subr.mxu0 0.0
          %736 = vmatpush1.msra.mxu0 0.0
          %737 = vmatprep.subr.mxu0 0.0
          %738 = vmatpush1.msra.mxu0 0.0
          %739 = vmatprep.subr.mxu0 0.0
          %740 = vmatpush1.msra.mxu0 0.0
          %741 = vmatprep.subr.mxu0 0.0
          %742 = vmatpush1.msra.mxu0 0.0
          %743 = vmatprep.subr.mxu0 0.0
          %744 = vmatpush1.msra.mxu0 0.0
          %745 = vmatprep.subr.mxu0 0.0
          %746 = vmatpush1.msra.mxu0 0.0
          %747 = vmatprep.subr.mxu0 0.0
          %748 = vmatpush1.msra.mxu0 0.0
          %749 = vmatprep.subr.mxu0 0.0
          %750 = vmatpush1.msra.mxu0 0.0
          %751 = vmatprep.subr.mxu0 0.0
          %752 = vmatpush1.msra.mxu0 0.0
          %753 = vmatprep.subr.mxu0 0.0
          %754 = vmatpush1.msra.mxu0 0.0
          %755 = vmatprep.subr.mxu0 0.0
          %756 = vmatpush1.msra.mxu0 0.0
          %757 = vmatprep.subr.mxu0 0.0
          %758 = vmatpush1.msra.mxu0 0.0
          %759 = vmatprep.subr.mxu0 0.0
          %760 = vmatpush1.msra.mxu0 0.0
          %761 = vmatprep.subr.mxu0 0.0
          %762 = vmatpush1.msra.mxu0 0.0
          %763 = vmatprep.subr.mxu0 0.0
          %764 = vmatpush1.msra.mxu0 0.0
          %765 = vmatprep.subr.mxu0 0.0
          %766 = vmatpush1.msra.mxu0 0.0
          %767 = vmatprep.subr.mxu0 0.0
          %768 = vmatpush1.msra.mxu0 0.0
          %769 = vmatprep.subr.mxu0 0.0
          %770 = vmatpush1.msra.mxu0 0.0
          %771 = vmatprep.subr.mxu0 0.0
          %772 = vmatpush1.msra.mxu0 0.0
          %773 = vmatprep.subr.mxu0 0.0
          %774 = vmatpush1.msra.mxu0 0.0
          %775 = vmatprep.mubr.f32.mxu0 0.0
          %776 = vmatmul.mubr.f32.gmra.mrb[0].mxu0 %v555
          %v777 = vpop.f32.mrb[0].mxu0
          %v778 = vadd.f32 0.0, %v777
          %v779 = vpop.f32.mrb[0].mxu0
          %v780 = vadd.f32 0.0, %v779
          %781 = vdwg.mxu0
          %s782 = smul.u32 %s27, 6
          %s783 = smul.addr %s782, 8
          %s784 = scalar_lea.vmem [#allocation2], %s783
          %785 = vst [vmem:[%s784] sm:$0xff] %v636
          %786 = vst [vmem:[%s784 + $0x8] sm:$0xff] %v638
          %787 = vst [vmem:[%s784 + $0x10] sm:$0xff] %v707
          %788 = vst [vmem:[%s784 + $0x18] sm:$0xff] %v709
          %789 = vst [vmem:[%s784 + $0x20] sm:$0xff] %v778
          %790 = vst [vmem:[%s784 + $0x28] sm:$0xff] %v780
          %v791 = vld [vmem:[%s4] sm:$0x3f]
          %v792 = vld [vmem:[#allocation3] sm:$0xff]
          %v794 = vlaneseq
          %v795 = vshrl.u32 %v794, 7
          %v796 = vsub.s32 0, %v795
          %v797 = vrot.slane %v791, %v796
          %v798 = vlaneseq
          %v799 = vshrl.u32 %v798, 7
          %v800 = vsub.s32 1, %v799
          %v801 = vrot.slane %v791, %v800
          %v802 = vlaneseq
          %v803 = vshrl.u32 %v802, 7
          %v804 = vsub.s32 2, %v803
          %v805 = vrot.slane %v791, %v804
          %v806 = vlaneseq
          %v807 = vshrl.u32 %v806, 7
          %v808 = vsub.s32 3, %v807
          %v809 = vrot.slane %v791, %v808
          %v810 = vlaneseq
          %v811 = vshrl.u32 %v810, 7
          %v812 = vsub.s32 4, %v811
          %v813 = vrot.slane %v791, %v812
          %v814 = vlaneseq
          %v815 = vshrl.u32 %v814, 7
          %v816 = vsub.s32 5, %v815
          %v817 = vrot.slane %v791, %v816
          %v824 = vmul.f32 %v636, %v797
          %v825 = vmul.f32 %v638, %v801
          %v826 = vmul.f32 %v707, %v805
          %v827 = vmul.f32 %v709, %v809
          %v828 = vmul.f32 %v778, %v813
          %v829 = vmul.f32 %v780, %v817
          %v830 = vadd.f32 %v824, %v825
          %v831 = vadd.f32 %v830, %v826
          %v832 = vadd.f32 %v831, %v827
          %v833 = vadd.f32 %v832, %v828
          %v834 = vadd.f32 %v833, %v829
          %835 = vadd.xlane.f32.xlu0 %v834
          %v836 = vpop.xlane.xlu0 %835
          %v837 = vadd.f32 %v792, %v836
          %vm838 = vcmask 7168
          %839 = vst.msk [vmem:[#allocation3] sm:$0xff] %vm838, %v837
          %v840 = vld [vmem:[#allocation4] sm:$0xff]
          %v841 = vmul.f32 %v636, %v636
          %v842 = vmul.f32 %v638, %v638
          %v843 = vmul.f32 %v707, %v707
          %v844 = vmul.f32 %v709, %v709
          %v845 = vmul.f32 %v778, %v778
          %v846 = vmul.f32 %v780, %v780
          %v847 = vmul.f32 %v841, %v797
          %v848 = vmul.f32 %v842, %v801
          %v849 = vmul.f32 %v843, %v805
          %v850 = vmul.f32 %v844, %v809
          %v851 = vmul.f32 %v845, %v813
          %v852 = vmul.f32 %v846, %v817
          %v853 = vadd.f32 %v847, %v848
          %v854 = vadd.f32 %v853, %v849
          %v855 = vadd.f32 %v854, %v850
          %v856 = vadd.f32 %v855, %v851
          %v857 = vadd.f32 %v856, %v852
          %858 = vadd.xlane.f32.xlu0 %v857
          %v859 = vpop.xlane.xlu0 %858
          %v860 = vadd.f32 %v840, %v859
          %861 = vst.msk [vmem:[#allocation4] sm:$0xff] %vm838, %v860
        $region48: #{tpu_custom_call.1} parent=39 // pred_fallthru
          _
        %p862 = scmp.eq.s32.totalorder %s26, 1
        // Predicated region
        $region53: #{tpu_custom_call.1} parent=39 // pred_check
          %p863 = pneg %p862
        $region54: #{tpu_custom_call.1} parent=39 // pred_check_branch
          %865 = sbr.rel (%p863) target = $region56
        $region55: #{tpu_custom_call.1} parent=39 // pred_region
          %p866 = scmp.eq.s32.totalorder %s27, 0
          // Predicated region
          $region57: #{tpu_custom_call.1} parent=55 // pred_check
            %p867 = pneg %p866
          $region58: #{tpu_custom_call.1} parent=55 // pred_check_branch
            %869 = sbr.rel (%p867) target = $region60
          $region59: #{tpu_custom_call.1} parent=55 // pred_region
            %v870 = vld [vmem:[#allocation3] sm:$0xff]
            %v871 = vmul.f32 %v870, 0.001953125
            %v872 = vld [vmem:[#allocation4] sm:$0xff]
            %v873 = vmul.f32 %v872, 0.001953125
            %v874 = vmul.f32 %v871, %v871
            %v875 = vsub.f32 %v873, %v874
            %v876 = vmax.f32 %v875, 0.0
            %v877 = vld [vmem:[%s2] sm:$0xff]
            %v878 = vadd.f32 %v876, 1e-05
            %v879 = vrsqrt.pop %v878
            %v880 = vmul.f32 %v877, %v879
            %vm881 = vcmask 7168
            %882 = vst.msk [vmem:[#allocation5] sm:$0xff] %vm881, %v880
            %v883 = vld [vmem:[%s3] sm:$0xff]
            %v884 = vmul.f32 %v871, %v880
            %v885 = vsub.f32 %v883, %v884
            %886 = vst.msk [vmem:[#allocation6] sm:$0xff] %vm881, %v885
          $region60: #{tpu_custom_call.1} parent=55 // pred_fallthru
            _
          %s887 = smul.u32 %s27, 6
          %s888 = smul.addr %s887, 8
          %s889 = scalar_lea.vmem [#allocation2], %s888
          %v890 = vld [vmem:[%s889] sm:$0xff]
          %v891 = vld [vmem:[%s889 + $0x8] sm:$0xff]
          %v892 = vld [vmem:[%s889 + $0x10] sm:$0xff]
          %v893 = vld [vmem:[%s889 + $0x18] sm:$0xff]
          %v894 = vld [vmem:[%s889 + $0x20] sm:$0xff]
          %v895 = vld [vmem:[%s889 + $0x28] sm:$0xff]
          %v896 = vld [vmem:[#allocation5] sm:$0xff]
          %898 = vset.pattern.permute.xlu0 0
          %899 = vperm.xlu0 %898, %v896
          %v900 = vpop.permute.xlu0 %899
          %v902 = vmul.f32 %v890, %v900
          %v903 = vmul.f32 %v891, %v900
          %v904 = vmul.f32 %v892, %v900
          %v905 = vmul.f32 %v893, %v900
          %v906 = vmul.f32 %v894, %v900
          %v907 = vmul.f32 %v895, %v900
          %v908 = vld [vmem:[#allocation6] sm:$0xff]
          %910 = vset.pattern.permute.xlu0 0
          %911 = vperm.xlu0 %910, %v908
          %v912 = vpop.permute.xlu0 %911
          %v914 = vadd.f32 %v902, %v912
          %v915 = vadd.f32 %v903, %v912
          %v916 = vadd.f32 %v904, %v912
          %v917 = vadd.f32 %v905, %v912
          %v918 = vadd.f32 %v906, %v912
          %v919 = vadd.f32 %v907, %v912
          %v920 = vmax.f32 %v914, 0.0
          %v921 = vmax.f32 %v915, 0.0
          %v922 = vmax.f32 %v916, 0.0
          %v923 = vmax.f32 %v917, 0.0
          %v924 = vmax.f32 %v918, 0.0
          %v925 = vmax.f32 %v919, 0.0
          %926 = vst [vmem:[%s263] sm:$0xff] %v920
          %927 = vst [vmem:[%s263 + $0x8] sm:$0xff] %v921
          %928 = vst [vmem:[%s263 + $0x10] sm:$0xff] %v922
          %s929 = scalar_lea.vmem %s263, 24 [#allocation10]
          %930 = vst [vmem:[%s929] sm:$0xff] %v923
          %931 = vst [vmem:[%s929 + $0x8] sm:$0xff] %v924
          %932 = vst [vmem:[%s929 + $0x10] sm:$0xff] %v925
        $region56: #{tpu_custom_call.1} parent=39 // pred_fallthru
          _
        %s933 = sand.u32 %s158, 1
        %s934 = scalar_lea.sflag [#allocation9], %s933
        %s935 = sand.u32 %s158, 1
        %s936 = smul.addr %s935, 48
        %s937 = scalar_lea.vmem [#allocation10], %s936
        // Predicated region
        $region61: #{tpu_custom_call.1} parent=39 // pred_check
          %p938 = pneg %p168
        $region62: #{tpu_custom_call.1} parent=39 // pred_check_branch
          %940 = sbr.rel (%p938) target = $region64
        $region63: #{tpu_custom_call.1} parent=39 // pred_region
          %s941 = smul.u32 %s27, %s26
          %s942 = smul.u32 2, %s941
          %s944 = ssub.s32 768, 768
          %945 = vsyncadd %s934, %s944
          %s946 = smul.addr %s942, 3
          %s947 = smul.addr %s946, 128
          %s948 = scalar_lea.hbm %s5, %s947
          %s949 = sshll.u32 %s937, 4
          %s950 = int_to_ptr.vmem [resolvable:$true] %s949
          %955 = dma.vmem_to_hbm [thread:$0]  %s950, 768, %s948, %s934, 384, 384, 24
        $region64: #{tpu_custom_call.1} parent=39 // pred_fallthru
          _
      $region40: #{tpu_custom_call.1} parent=5 // pred_fallthru
        _
      %p956 = scmp.le.s32.totalorder 2, %s17
      // Predicated region
      $region65: #{tpu_custom_call.1} parent=5 // pred_check
        %p957 = pneg %p956
      $region66: #{tpu_custom_call.1} parent=5 // pred_check_branch
        %959 = sbr.rel (%p957) target = $region68
      $region67: #{tpu_custom_call.1} parent=5 // pred_region
        %s960 = ssub.s32 %s17, 2
        // Predicated region
        $region69: #{tpu_custom_call.1} parent=67 // pred_check
          %p961 = pneg %p174
        $region70: #{tpu_custom_call.1} parent=67 // pred_check_branch
          %963 = sbr.rel (%p961) target = $region72
        $region71: #{tpu_custom_call.1} parent=67 // pred_region
          %s964 = sand.u32 %s159, 1
          %s965 = scalar_lea.sflag [#allocation9], %s964
          %s966 = sand.u32 %s159, 1
          %s967 = smul.addr %s966, 48
          %s968 = scalar_lea.vmem [#allocation10], %s967
          %969 = dma.done %s965, 768
        $region72: #{tpu_custom_call.1} parent=67 // pred_fallthru
          _
      $region68: #{tpu_custom_call.1} parent=5 // pred_fallthru
        _
    $region6: #{tpu_custom_call.1} parent=1 // loop_footer
      %s21 = sadd.s32 1, %s17
    $region7: #{tpu_custom_call.1} parent=1 // loop_footer_branch
      %16 = sbr.rel target = $region3
    $region8: #{tpu_custom_call.1} parent=1 // loop_exit
      _
    %970 = vsyncpa [#allocation8], 1
    %s971 = scalar_lea.sflag [#allocation8], 1
    %972 = vsyncpa %s971, 1
    %973 = vsyncpa [#allocation9], 1
    %s974 = scalar_lea.sflag [#allocation9], 1
    %975 = vsyncpa %s974, 1

</llo_original>
